<compile_context>
chip_gen: v5e
topology: v5e:2x2
jax: 0.10.0
libtpu: 0.0.40
codegen_flags: <defaults>
</compile_context>

<pallas_src>
import math

import jax
import jax.numpy as jnp
import numpy as np
from jax import lax
from jax.experimental import pallas as pl
from jax.experimental.pallas import tpu as pltpu


def cross_layer_kernel(prot_ref, drug_ref,
                       w1p_ref, w1d_ref, w1c_ref, b1_ref,
                       w2_ref, b2_ref, w3_ref, b3_ref,
                       out_ref):
    wdt = w1p_ref.dtype                      # bf16 (or f32 if disabled)
    dmin = w1c_ref.shape[0]                  # static: min(Dp, Dd)

    p = prot_ref[...]                        # (Bt, Dp) f32
    d = drug_ref[...]                        # (Bt, Dd) f32
    cross = p[:, :dmin] * d[:, :dmin]        # (Bt, Dmin) f32, VPU

    # fc1 over the implicit concat [p, d, cross]: three accumulated MXU
    # matmuls (bf16 operands, f32 accumulation), no concat materialized.
    h = jnp.dot(p.astype(wdt), w1p_ref[...],
                preferred_element_type=jnp.float32)
    h = h + jnp.dot(d.astype(wdt), w1d_ref[...],
                    preferred_element_type=jnp.float32)
    h = h + jnp.dot(cross.astype(wdt), w1c_ref[...],
                    preferred_element_type=jnp.float32)
    h = jnp.maximum(h + b1_ref[...], 0.0)    # (Bt, H) f32

    # fc2 + ReLU (bias folded into the max).
    h2 = jnp.maximum(
        jnp.dot(h.astype(wdt), w2_ref[...],
                preferred_element_type=jnp.float32) + b2_ref[...],
        0.0)                                 # (Bt, H) f32

    # fc3 (H -> 1), lane-dense: (1,H) x (Bt,H)^T -> (1, Bt) on the MXU so the
    # output block is a dense row of lanes (no masked (Bt,1) stores).
    row = lax.dot_general(
        w3_ref[...], h2.astype(wdt),
        dimension_numbers=(((1,), (1,)), ((), ())),
        preferred_element_type=jnp.float32)  # (1, Bt)
    out_ref[...] = (row + b3_ref[0]).astype(out_ref.dtype)


def cross_layer(protein, drug, params, *, block_b=512, use_bf16=True):
    """protein: (B, Dp), drug: (B, Dd). Returns interaction (B, 1) in f32."""
    B, Dp = protein.shape
    Bd, Dd = drug.shape
    assert Bd == B
    Dmax = max(Dp, Dd)
    Dmin = min(Dp, Dd)

    w1, b1, w2, b2, w3, b3 = params
    H = w1.shape[0]
    assert w1.shape[1] == 3 * Dmax, "fc1 input_dim must equal 3 * max(Dp, Dd)"

    wdt = jnp.bfloat16 if use_bf16 else jnp.float32

    # Pre-transpose once to (in, out) layout and slice the fc1 weight into its
    # protein / drug / cross column blocks at the REAL (unpadded) widths.
    w1t = w1.T                                   # (3*Dmax, H)
    w1p = w1t[:Dp].astype(wdt)                   # (Dp,   H)
    w1d = w1t[Dmax:Dmax + Dd].astype(wdt)        # (Dd,   H)
    w1c = w1t[2 * Dmax:2 * Dmax + Dmin].astype(wdt)  # (Dmin, H)
    w2t = w2.T.astype(wdt)                       # (H, H)
    w3r = w3.reshape(1, H).astype(wdt)           # fc3 as a row vector
    b1r = b1.reshape(1, H).astype(jnp.float32)
    b2r = b2.reshape(1, H).astype(jnp.float32)
    b3s = b3.reshape(1).astype(jnp.float32)      # SMEM scalar

    # Batch tiling: lane/MXU-aligned tiles; ensure >= 2 grid steps for large
    # batches so both v7x TensorCores are used.
    if B <= 256:
        Bt = B                                   # single step, full batch
    else:
        Bt = min(block_b, -(-B // 2))            # at least 2 grid steps
        Bt = max(128, (Bt // 128) * 128)         # multiple of 128
    pad_b = (-B) % Bt
    if pad_b:
        protein = jnp.pad(protein, ((0, pad_b), (0, 0)))
        drug = jnp.pad(drug, ((0, pad_b), (0, 0)))
    Bp = B + pad_b
    grid = (Bp // Bt,)

    in_bytes = protein.dtype.itemsize
    w_bytes = jnp.dtype(wdt).itemsize

    flops = Bp * (2 * (Dp + Dd + Dmin) * H + 2 * H * H + 2 * H + Dmin)
    bytes_accessed = (in_bytes * Bp * (Dp + Dd)
                      + w_bytes * ((Dp + Dd + Dmin) * H + H * H + H)
                      + 4 * (2 * H + 1)
                      + 4 * Bp)
    cost = pl.CostEstimate(flops=flops, transcendentals=0,
                           bytes_accessed=bytes_accessed)

    # Explicit VMEM budget (scoped defaults are only 16/32 MiB); clamp to
    # 64 MiB so it is valid on v7x as well as v5e/v6e.
    weight_bytes = ((Dp + Dd + Dmin) * H + H * H + H) * w_bytes + 2 * H * 4
    tile_bytes = (2 * Bt * (Dp + Dd) * in_bytes   # double-buffered input tiles
                  + 2 * weight_bytes              # weights (worst-case 2x)
                  + 2 * Bt * 4                    # output blocks
                  + 4 * Bt * H * 4)               # live f32 activations
    vmem_limit = int(min(max(2 * tile_bytes, 32 * 1024 * 1024),
                         64 * 1024 * 1024))

    fixed = lambda shape: pl.BlockSpec(shape, lambda b: (0,) * len(shape))

    out = pl.pallas_call(
        cross_layer_kernel,
        out_shape=jax.ShapeDtypeStruct((1, Bp), jnp.float32),
        grid_spec=pltpu.PrefetchScalarGridSpec(
            num_scalar_prefetch=0,
            grid=grid,
            in_specs=[
                pl.BlockSpec((Bt, Dp), lambda b: (b, 0)),   # protein tile
                pl.BlockSpec((Bt, Dd), lambda b: (b, 0)),   # drug tile
                fixed((Dp, H)),     # w1p
                fixed((Dd, H)),     # w1d
                fixed((Dmin, H)),   # w1c
                fixed((1, H)),      # b1
                fixed((H, H)),      # w2t
                fixed((1, H)),      # b2
                fixed((1, H)),      # w3 row
                pl.BlockSpec(memory_space=pltpu.MemorySpace.SMEM),  # b3 scalar
            ],
            out_specs=pl.BlockSpec((1, Bt), lambda b: (0, b)),
        ),
        compiler_params=pltpu.CompilerParams(
            dimension_semantics=("parallel",),
            vmem_limit_bytes=vmem_limit),
        cost_estimate=cost,
    )(protein, drug, w1p, w1d, w1c, b1r, w2t, b2r, w3r, b3s)

    return out[0, :B].reshape(B, 1)


def init_params(key, input_dim, hidden_dim):
    """PyTorch nn.Linear-style init: U(-1/sqrt(fan_in), 1/sqrt(fan_in))."""
    ks = jax.random.split(key, 6)

    def linear(kw, kb, fan_out, fan_in):
        bound = 1.0 / math.sqrt(fan_in)
        w = jax.random.uniform(kw, (fan_out, fan_in), jnp.float32, -bound, bound)
        b = jax.random.uniform(kb, (fan_out,), jnp.float32, -bound, bound)
        return w, b

    w1, b1 = linear(ks[0], ks[1], hidden_dim, input_dim)
    w2, b2 = linear(ks[2], ks[3], hidden_dim, hidden_dim)
    w3, b3 = linear(ks[4], ks[5], 1, hidden_dim)
    return (w1, b1, w2, b2, w3, b3)


def reference(protein, drug, params):
    """Pure-JAX f32 reference mirroring the PyTorch forward."""
    w1, b1, w2, b2, w3, b3 = params
    Dp, Dd = protein.shape[1], drug.shape[1]
    Dmax = max(Dp, Dd)
    p = jnp.pad(protein, ((0, 0), (0, Dmax - Dp)))
    d = jnp.pad(drug, ((0, 0), (0, Dmax - Dd)))
    cat = jnp.concatenate([p, d, p * d], axis=-1)
    x = jnp.maximum(cat @ w1.T + b1, 0.0)
    x = jnp.maximum(x @ w2.T + b2, 0.0)
    return x @ w3.T + b3


if __name__ == "__main__":
    protein_dim = 32
    drug_dim = 16
    hidden_dim = 32
    max_dim = max(protein_dim, drug_dim)
    input_dim = 3 * max_dim   # fc1 expects the concatenated width

    key = jax.random.PRNGKey(0)
    k_prot, k_drug, k_par, k_prot2, k_drug2 = jax.random.split(key, 5)
    params = init_params(k_par, input_dim, hidden_dim)

    # bf16 MXU operands with f32 accumulation -> compare to f32 reference at a
    # loosened tolerance.
    RTOL, ATOL = 5e-2, 5e-2

    # --- small case: single grid step ---
    B = 8
    protein = jax.random.normal(k_prot, (B, protein_dim), jnp.float32)
    drug = jax.random.normal(k_drug, (B, drug_dim), jnp.float32)

    out = cross_layer(protein, drug, params)
    jax.block_until_ready(out)
    out_ref = reference(protein, drug, params)
    assert out.shape == (B, 1)
    np.testing.assert_allclose(np.asarray(out), np.asarray(out_ref),
                               rtol=RTOL, atol=ATOL)

    # --- larger case: exercises batch padding + multi-step (megacore) grid ---
    B2 = 300
    protein2 = jax.random.normal(k_prot2, (B2, protein_dim), jnp.float32)
    drug2 = jax.random.normal(k_drug2, (B2, drug_dim), jnp.float32)

    out2 = cross_layer(protein2, drug2, params)
    jax.block_until_ready(out2)
    out2_ref = reference(protein2, drug2, params)
    assert out2.shape == (B2, 1)
    np.testing.assert_allclose(np.asarray(out2), np.asarray(out2_ref),
                               rtol=RTOL, atol=ATOL)

    print("KERNEL_OK")
</pallas_src>

<mosaic_0001>
module attributes {stable_mosaic.version = 11 : i64} {
  func.func @cross_layer_kernel(%arg0: i32, %arg1: memref<8x32xf32, #tpu.memory_space<vmem>>, %arg2: memref<8x16xf32, #tpu.memory_space<vmem>>, %arg3: memref<32x32xbf16, #tpu.memory_space<vmem>>, %arg4: memref<16x32xbf16, #tpu.memory_space<vmem>>, %arg5: memref<16x32xbf16, #tpu.memory_space<vmem>>, %arg6: memref<1x32xf32, #tpu.memory_space<vmem>>, %arg7: memref<32x32xbf16, #tpu.memory_space<vmem>>, %arg8: memref<1x32xf32, #tpu.memory_space<vmem>>, %arg9: memref<1x32xbf16, #tpu.memory_space<vmem>>, %arg10: memref<1xf32, #tpu.memory_space<smem>>, %arg11: memref<1x8xf32, #tpu.memory_space<vmem>>) attributes {dimension_semantics = [#tpu.dimension_semantics<parallel>], iteration_bounds = array<i64: 1>, scalar_prefetch = 0 : i64, scratch_operands = 0 : i64, tpu.core_type = #tpu.core_type<tc>, window_params = [{transform_indices = @transform_0, window_bounds = array<i64: 8, 32>}, {transform_indices = @transform_1, window_bounds = array<i64: 8, 16>}, {pipeline_mode = #tpu.pipeline_mode<synchronous>, transform_indices = @transform_2, window_bounds = array<i64: 32, 32>}, {pipeline_mode = #tpu.pipeline_mode<synchronous>, transform_indices = @transform_3, window_bounds = array<i64: 16, 32>}, {pipeline_mode = #tpu.pipeline_mode<synchronous>, transform_indices = @transform_4, window_bounds = array<i64: 16, 32>}, {pipeline_mode = #tpu.pipeline_mode<synchronous>, transform_indices = @transform_5, window_bounds = array<i64: 1, 32>}, {pipeline_mode = #tpu.pipeline_mode<synchronous>, transform_indices = @transform_6, window_bounds = array<i64: 32, 32>}, {pipeline_mode = #tpu.pipeline_mode<synchronous>, transform_indices = @transform_7, window_bounds = array<i64: 1, 32>}, {pipeline_mode = #tpu.pipeline_mode<synchronous>, transform_indices = @transform_8, window_bounds = array<i64: 1, 32>}, {transform_indices = @transform_9, window_bounds = array<i64: 1>}, {transform_indices = @transform_10, window_bounds = array<i64: 1, 8>}]} {
    %c0 = arith.constant 0 : index
    %c0_0 = arith.constant 0 : index
    %0 = vector.load %arg1[%c0, %c0_0] : memref<8x32xf32, #tpu.memory_space<vmem>>, vector<8x32xf32>
    %c0_1 = arith.constant 0 : index
    %c0_2 = arith.constant 0 : index
    %1 = vector.load %arg2[%c0_1, %c0_2] : memref<8x16xf32, #tpu.memory_space<vmem>>, vector<8x16xf32>
    %2 = vector.extract_strided_slice %0 {offsets = [0, 0], sizes = [8, 16], strides = [1, 1]} : vector<8x32xf32> to vector<8x16xf32>
    %3 = arith.mulf %2, %1 : vector<8x16xf32>
    %4 = arith.truncf %0 : vector<8x32xf32> to vector<8x32xbf16>
    %c0_3 = arith.constant 0 : index
    %c0_4 = arith.constant 0 : index
    %5 = vector.load %arg3[%c0_3, %c0_4] : memref<32x32xbf16, #tpu.memory_space<vmem>>, vector<32x32xbf16>
    %cst = arith.constant dense<0.000000e+00> : vector<8x32xf32>
    %6 = tpu.matmul %4, %5, %cst {dimension_numbers = #tpu.dot_dimension_numbers<[1], [0], [0], [1], [0, 0, 1, 1], [], []>} : vector<8x32xbf16>, vector<32x32xbf16>, vector<8x32xf32> -> vector<8x32xf32>
    %7 = arith.truncf %1 : vector<8x16xf32> to vector<8x16xbf16>
    %c0_5 = arith.constant 0 : index
    %c0_6 = arith.constant 0 : index
    %8 = vector.load %arg4[%c0_5, %c0_6] : memref<16x32xbf16, #tpu.memory_space<vmem>>, vector<16x32xbf16>
    %cst_7 = arith.constant dense<0.000000e+00> : vector<8x32xf32>
    %9 = tpu.matmul %7, %8, %cst_7 {dimension_numbers = #tpu.dot_dimension_numbers<[1], [0], [0], [1], [0, 0, 1, 1], [], []>} : vector<8x16xbf16>, vector<16x32xbf16>, vector<8x32xf32> -> vector<8x32xf32>
    %10 = arith.addf %6, %9 : vector<8x32xf32>
    %11 = arith.truncf %3 : vector<8x16xf32> to vector<8x16xbf16>
    %c0_8 = arith.constant 0 : index
    %c0_9 = arith.constant 0 : index
    %12 = vector.load %arg5[%c0_8, %c0_9] : memref<16x32xbf16, #tpu.memory_space<vmem>>, vector<16x32xbf16>
    %cst_10 = arith.constant dense<0.000000e+00> : vector<8x32xf32>
    %13 = tpu.matmul %11, %12, %cst_10 {dimension_numbers = #tpu.dot_dimension_numbers<[1], [0], [0], [1], [0, 0, 1, 1], [], []>} : vector<8x16xbf16>, vector<16x32xbf16>, vector<8x32xf32> -> vector<8x32xf32>
    %14 = arith.addf %10, %13 : vector<8x32xf32>
    %c0_11 = arith.constant 0 : index
    %c0_12 = arith.constant 0 : index
    %15 = vector.load %arg6[%c0_11, %c0_12] : memref<1x32xf32, #tpu.memory_space<vmem>>, vector<1x32xf32>
    %16 = vector.broadcast %15 : vector<1x32xf32> to vector<8x32xf32>
    %17 = arith.addf %14, %16 : vector<8x32xf32>
    %cst_13 = arith.constant 0.000000e+00 : f32
    %18 = vector.broadcast %cst_13 : f32 to vector<8x32xf32>
    %19 = arith.maximumf %17, %18 : vector<8x32xf32>
    %20 = arith.truncf %19 : vector<8x32xf32> to vector<8x32xbf16>
    %c0_14 = arith.constant 0 : index
    %c0_15 = arith.constant 0 : index
    %21 = vector.load %arg7[%c0_14, %c0_15] : memref<32x32xbf16, #tpu.memory_space<vmem>>, vector<32x32xbf16>
    %cst_16 = arith.constant dense<0.000000e+00> : vector<8x32xf32>
    %22 = tpu.matmul %20, %21, %cst_16 {dimension_numbers = #tpu.dot_dimension_numbers<[1], [0], [0], [1], [0, 0, 1, 1], [], []>} : vector<8x32xbf16>, vector<32x32xbf16>, vector<8x32xf32> -> vector<8x32xf32>
    %c0_17 = arith.constant 0 : index
    %c0_18 = arith.constant 0 : index
    %23 = vector.load %arg8[%c0_17, %c0_18] : memref<1x32xf32, #tpu.memory_space<vmem>>, vector<1x32xf32>
    %24 = vector.broadcast %23 : vector<1x32xf32> to vector<8x32xf32>
    %25 = arith.addf %22, %24 : vector<8x32xf32>
    %cst_19 = arith.constant 0.000000e+00 : f32
    %26 = vector.broadcast %cst_19 : f32 to vector<8x32xf32>
    %27 = arith.maximumf %25, %26 : vector<8x32xf32>
    %c0_20 = arith.constant 0 : index
    %c0_21 = arith.constant 0 : index
    %28 = vector.load %arg9[%c0_20, %c0_21] : memref<1x32xbf16, #tpu.memory_space<vmem>>, vector<1x32xbf16>
    %29 = arith.truncf %27 : vector<8x32xf32> to vector<8x32xbf16>
    %cst_22 = arith.constant dense<0.000000e+00> : vector<1x8xf32>
    %30 = tpu.matmul %28, %29, %cst_22 {dimension_numbers = #tpu.dot_dimension_numbers<[1], [1], [0], [0], [0, 0, 1, 0], [], []>} : vector<1x32xbf16>, vector<8x32xbf16>, vector<1x8xf32> -> vector<1x8xf32>
    %c0_23 = arith.constant 0 : index
    %31 = memref.load %arg10[%c0_23] : memref<1xf32, #tpu.memory_space<smem>>
    %32 = vector.broadcast %31 : f32 to vector<1x8xf32>
    %33 = arith.addf %30, %32 : vector<1x8xf32>
    %c0_24 = arith.constant 0 : index
    %c0_25 = arith.constant 0 : index
    %34 = vector.load %arg11[%c0_24, %c0_25] : memref<1x8xf32, #tpu.memory_space<vmem>>, vector<1x8xf32>
    tpu.vector_store %arg11[%c0_24, %c0_25], %33 {strides = array<i32>} : memref<1x8xf32, #tpu.memory_space<vmem>>, vector<1x8xf32>,
    return
  }
  func.func @transform_0(%arg0: i32) -> (i32, i32) {
    %c0_i32 = arith.constant 0 : i32
    %c0_i32_0 = arith.constant 0 : i32
    return %arg0, %c0_i32 : i32, i32
  }
  func.func @transform_1(%arg0: i32) -> (i32, i32) {
    %c0_i32 = arith.constant 0 : i32
    %c0_i32_0 = arith.constant 0 : i32
    return %arg0, %c0_i32 : i32, i32
  }
  func.func @transform_2(%arg0: i32) -> (i32, i32) {
    %c0_i32 = arith.constant 0 : i32
    %c0_i32_0 = arith.constant 0 : i32
    %c0_i32_1 = arith.constant 0 : i32
    return %c0_i32, %c0_i32_0 : i32, i32
  }
  func.func @transform_3(%arg0: i32) -> (i32, i32) {
    %c0_i32 = arith.constant 0 : i32
    %c0_i32_0 = arith.constant 0 : i32
    %c0_i32_1 = arith.constant 0 : i32
    return %c0_i32, %c0_i32_0 : i32, i32
  }
  func.func @transform_4(%arg0: i32) -> (i32, i32) {
    %c0_i32 = arith.constant 0 : i32
    %c0_i32_0 = arith.constant 0 : i32
    %c0_i32_1 = arith.constant 0 : i32
    return %c0_i32, %c0_i32_0 : i32, i32
  }
  func.func @transform_5(%arg0: i32) -> (i32, i32) {
    %c0_i32 = arith.constant 0 : i32
    %c0_i32_0 = arith.constant 0 : i32
    %c0_i32_1 = arith.constant 0 : i32
    return %c0_i32, %c0_i32_0 : i32, i32
  }
  func.func @transform_6(%arg0: i32) -> (i32, i32) {
    %c0_i32 = arith.constant 0 : i32
    %c0_i32_0 = arith.constant 0 : i32
    %c0_i32_1 = arith.constant 0 : i32
    return %c0_i32, %c0_i32_0 : i32, i32
  }
  func.func @transform_7(%arg0: i32) -> (i32, i32) {
    %c0_i32 = arith.constant 0 : i32
    %c0_i32_0 = arith.constant 0 : i32
    %c0_i32_1 = arith.constant 0 : i32
    return %c0_i32, %c0_i32_0 : i32, i32
  }
  func.func @transform_8(%arg0: i32) -> (i32, i32) {
    %c0_i32 = arith.constant 0 : i32
    %c0_i32_0 = arith.constant 0 : i32
    %c0_i32_1 = arith.constant 0 : i32
    return %c0_i32, %c0_i32_0 : i32, i32
  }
  func.func @transform_9(%arg0: i32) -> i32 {
    %c0_i32 = arith.constant 0 : i32
    %c0_i32_0 = arith.constant 0 : i32
    return %c0_i32 : i32
  }
  func.func @transform_10(%arg0: i32) -> (i32, i32) {
    %c0_i32 = arith.constant 0 : i32
    %c0_i32_0 = arith.constant 0 : i32
    return %c0_i32, %arg0 : i32, i32
  }
}

</mosaic_0001>

<llo_original>
// kernel: tpu_custom_call.1
$region0: #{tpu_custom_call.1}
  #allocation0 [shape = 'u32[]', space=smem, size = 0x4, offset = 0x4, fixed_abs, tag = 'smem constant byte address 0x4 - core index']
  #allocation1 [shape = 'u32[72,128]{1,0:T(1,128)}', space=vmem, size = 0x9000, scoped, tag = 'internal scratch']
  #allocation2 [shape = 'f32[1]{0:T(128)S(6)}', space=smem, size = 0x200, scoped, tag = 'scoped memory for tpu_custom_call.1']
  %s0 = inlined_call_operand.hbm [shape: f32[8,32], index: 0, kind: input, shape index: {}]
  %s1 = inlined_call_operand.hbm [shape: f32[8,16], index: 1, kind: input, shape index: {}]
  %s2 = inlined_call_operand.hbm [shape: bf16[32,32], index: 2, kind: input, shape index: {}]
  %s3 = inlined_call_operand.hbm [shape: bf16[16,32], index: 3, kind: input, shape index: {}]
  %s4 = inlined_call_operand.hbm [shape: bf16[16,32], index: 4, kind: input, shape index: {}]
  %s5 = inlined_call_operand.vmem [shape: f32[1,32], index: 5, kind: input, shape index: {}]
  %s6 = inlined_call_operand.hbm [shape: bf16[32,32], index: 6, kind: input, shape index: {}]
  %s7 = inlined_call_operand.vmem [shape: f32[1,32], index: 7, kind: input, shape index: {}]
  %s8 = inlined_call_operand.vmem [shape: bf16[1,32], index: 8, kind: input, shape index: {}]
  %s9 = inlined_call_operand.<no memory space> [shape: f32[1], index: 9, kind: input, shape index: {}]
  %s10 = inlined_call_operand.hbm [shape: f32[1,8], index: 10, kind: output, shape index: {}]
  %s11 = sld [smem:[#allocation0]]
  $region74: #{tpu_custom_call.1} parent=0
    _
  %s13 = ssub.s32 1, %s11
  %s14 = scalar_select 0, %s13, %s11
  %15 = sst [smem:[#allocation2]] %s9
  $region1: #{tpu_custom_call.1} parent=0
    #allocation3 [shape = 'u8[4096]{0}', space=vmem, size = 0x1000, scoped, tag = 'input window, operand 0, single buffered']
    #allocation4 [shape = 's32[1]{0}', space=sflag, size = 0x4, scoped, tag = 'scoped memory for tpu_custom_call.1']
    #allocation5 [shape = 's32[1]{0}', space=sflag, size = 0x4, scoped, tag = 'scoped memory for tpu_custom_call.1']
    #allocation6 [shape = 'u8[4096]{0}', space=vmem, size = 0x1000, scoped, tag = 'input window, operand 1, single buffered']
    #allocation7 [shape = 's32[1]{0}', space=sflag, size = 0x4, scoped, tag = 'scoped memory for tpu_custom_call.1']
    #allocation8 [shape = 'u8[8192]{0}', space=vmem, size = 0x2000, scoped, tag = 'input window, operand 2, single buffered']
    #allocation9 [shape = 'u8[4096]{0}', space=vmem, size = 0x1000, scoped, tag = 'input window, operand 3, single buffered']
    #allocation10 [shape = 's32[1]{0}', space=sflag, size = 0x4, scoped, tag = 'scoped memory for tpu_custom_call.1']
    #allocation11 [shape = 'u8[4096]{0}', space=vmem, size = 0x1000, scoped, tag = 'input window, operand 4, single buffered']
    #allocation12 [shape = 'u8[8192]{0}', space=vmem, size = 0x2000, scoped, tag = 'input window, operand 6, single buffered']
    #allocation13 [shape = 's32[1]{0}', space=sflag, size = 0x4, scoped, tag = 'scoped memory for tpu_custom_call.1']
    #allocation14 [shape = 'u8[512]{0}', space=vmem, size = 0x400, scoped, tag = 'output window, operand 0, single buffered']
    %16 = vsyncpa [#allocation4], 0
    %17 = vsyncpa [#allocation7], 0
    %18 = vsyncpa [#allocation10], 0
    %19 = vsyncpa [#allocation13], 0
    %20 = vsyncpa [#allocation5], 0
    // Predicated region
    $region2: #{tpu_custom_call.1} parent=1 // pred_check
      _
    $region3: #{tpu_custom_call.1} parent=1 // pred_check_branch
      %22 = sbr.rel (0) target = $region5
    $region4: #{tpu_custom_call.1} parent=1 // pred_region
      %24 = vsyncadd [#allocation4], 0
      %s26 = sshll.u32 %s0, 4
      %s27 = int_to_ptr.hbm [resolvable:$true] %s26
      %s28 = sshll.u32 [#allocation3], 4
      %s29 = int_to_ptr.vmem [resolvable:$true] %s28
      %31 = dma.hbm_to_vmem [thread:$0]  %s27, 128, %s29, [#allocation4]
    $region5: #{tpu_custom_call.1} parent=1 // pred_fallthru
      _
    // Predicated region
    $region6: #{tpu_custom_call.1} parent=1 // pred_check
      _
    $region7: #{tpu_custom_call.1} parent=1 // pred_check_branch
      %33 = sbr.rel (0) target = $region9
    $region8: #{tpu_custom_call.1} parent=1 // pred_region
      %35 = vsyncadd [#allocation7], 0
      %s37 = sshll.u32 %s1, 4
      %s38 = int_to_ptr.hbm [resolvable:$true] %s37
      %s39 = sshll.u32 [#allocation6], 4
      %s40 = int_to_ptr.vmem [resolvable:$true] %s39
      %42 = dma.hbm_to_vmem [thread:$0]  %s38, 128, %s40, [#allocation7]
    $region9: #{tpu_custom_call.1} parent=1 // pred_fallthru
      _
    // Predicated region
    $region10: #{tpu_custom_call.1} parent=1 // pred_check
      _
    $region11: #{tpu_custom_call.1} parent=1 // pred_check_branch
      %44 = sbr.rel (0) target = $region13
    $region12: #{tpu_custom_call.1} parent=1 // pred_region
      %46 = vsyncadd [#allocation7], 0
      %s47 = sshll.u32 %s2, 4
      %s48 = int_to_ptr.hbm [resolvable:$true] %s47
      %s49 = sshll.u32 [#allocation8], 4
      %s50 = int_to_ptr.vmem [resolvable:$true] %s49
      %55 = dma.hbm_to_vmem [thread:$0]  %s48, 256, %s50, [#allocation7], 64, 64, 4
    $region13: #{tpu_custom_call.1} parent=1 // pred_fallthru
      _
    // Predicated region
    $region14: #{tpu_custom_call.1} parent=1 // pred_check
      _
    $region15: #{tpu_custom_call.1} parent=1 // pred_check_branch
      %57 = sbr.rel (0) target = $region17
    $region16: #{tpu_custom_call.1} parent=1 // pred_region
      %59 = vsyncadd [#allocation10], 0
      %s60 = sshll.u32 %s3, 4
      %s61 = int_to_ptr.hbm [resolvable:$true] %s60
      %s62 = sshll.u32 [#allocation9], 4
      %s63 = int_to_ptr.vmem [resolvable:$true] %s62
      %68 = dma.hbm_to_vmem [thread:$0]  %s61, 128, %s63, [#allocation10], 64, 64, 4
    $region17: #{tpu_custom_call.1} parent=1 // pred_fallthru
      _
    // Predicated region
    $region18: #{tpu_custom_call.1} parent=1 // pred_check
      _
    $region19: #{tpu_custom_call.1} parent=1 // pred_check_branch
      %70 = sbr.rel (0) target = $region21
    $region20: #{tpu_custom_call.1} parent=1 // pred_region
      %72 = vsyncadd [#allocation10], 0
      %s73 = sshll.u32 %s4, 4
      %s74 = int_to_ptr.hbm [resolvable:$true] %s73
      %s75 = sshll.u32 [#allocation11], 4
      %s76 = int_to_ptr.vmem [resolvable:$true] %s75
      %81 = dma.hbm_to_vmem [thread:$0]  %s74, 128, %s76, [#allocation10], 64, 64, 4
    $region21: #{tpu_custom_call.1} parent=1 // pred_fallthru
      _
    // Predicated region
    $region22: #{tpu_custom_call.1} parent=1 // pred_check
      _
    $region23: #{tpu_custom_call.1} parent=1 // pred_check_branch
      %83 = sbr.rel (0) target = $region25
    $region24: #{tpu_custom_call.1} parent=1 // pred_region
      _
    $region25: #{tpu_custom_call.1} parent=1 // pred_fallthru
      _
    // Predicated region
    $region26: #{tpu_custom_call.1} parent=1 // pred_check
      _
    $region27: #{tpu_custom_call.1} parent=1 // pred_check_branch
      %85 = sbr.rel (0) target = $region29
    $region28: #{tpu_custom_call.1} parent=1 // pred_region
      %87 = vsyncadd [#allocation13], 0
      %s88 = sshll.u32 %s6, 4
      %s89 = int_to_ptr.hbm [resolvable:$true] %s88
      %s90 = sshll.u32 [#allocation12], 4
      %s91 = int_to_ptr.vmem [resolvable:$true] %s90
      %96 = dma.hbm_to_vmem [thread:$0]  %s89, 256, %s91, [#allocation13], 64, 64, 4
    $region29: #{tpu_custom_call.1} parent=1 // pred_fallthru
      _
    // Predicated region
    $region30: #{tpu_custom_call.1} parent=1 // pred_check
      _
    $region31: #{tpu_custom_call.1} parent=1 // pred_check_branch
      %98 = sbr.rel (0) target = $region33
    $region32: #{tpu_custom_call.1} parent=1 // pred_region
      _
    $region33: #{tpu_custom_call.1} parent=1 // pred_fallthru
      _
    // Predicated region
    $region34: #{tpu_custom_call.1} parent=1 // pred_check
      _
    $region35: #{tpu_custom_call.1} parent=1 // pred_check_branch
      %100 = sbr.rel (0) target = $region37
    $region36: #{tpu_custom_call.1} parent=1 // pred_region
      _
    $region37: #{tpu_custom_call.1} parent=1 // pred_fallthru
      _
    // Predicated region
    $region38: #{tpu_custom_call.1} parent=1 // pred_check
      _
    $region39: #{tpu_custom_call.1} parent=1 // pred_check_branch
      %102 = sbr.rel (0) target = $region41
    $region40: #{tpu_custom_call.1} parent=1 // pred_region
      _
    $region41: #{tpu_custom_call.1} parent=1 // pred_fallthru
      _
    // Predicated region
    $region42: #{tpu_custom_call.1} parent=1 // pred_check
      _
    $region43: #{tpu_custom_call.1} parent=1 // pred_check_branch
      %104 = sbr.rel (0) target = $region45
    $region44: #{tpu_custom_call.1} parent=1 // pred_region
      %106 = dma.done [#allocation4], 128
    $region45: #{tpu_custom_call.1} parent=1 // pred_fallthru
      _
    // Predicated region
    $region46: #{tpu_custom_call.1} parent=1 // pred_check
      _
    $region47: #{tpu_custom_call.1} parent=1 // pred_check_branch
      %108 = sbr.rel (0) target = $region49
    $region48: #{tpu_custom_call.1} parent=1 // pred_region
      %110 = dma.done [#allocation7], 128
    $region49: #{tpu_custom_call.1} parent=1 // pred_fallthru
      _
    // Predicated region
    $region50: #{tpu_custom_call.1} parent=1 // pred_check
      _
    $region51: #{tpu_custom_call.1} parent=1 // pred_check_branch
      %112 = sbr.rel (0) target = $region53
    $region52: #{tpu_custom_call.1} parent=1 // pred_region
      %114 = dma.done [#allocation7], 256
    $region53: #{tpu_custom_call.1} parent=1 // pred_fallthru
      _
    // Predicated region
    $region54: #{tpu_custom_call.1} parent=1 // pred_check
      _
    $region55: #{tpu_custom_call.1} parent=1 // pred_check_branch
      %116 = sbr.rel (0) target = $region57
    $region56: #{tpu_custom_call.1} parent=1 // pred_region
      %118 = dma.done [#allocation10], 128
    $region57: #{tpu_custom_call.1} parent=1 // pred_fallthru
      _
    // Predicated region
    $region58: #{tpu_custom_call.1} parent=1 // pred_check
      _
    $region59: #{tpu_custom_call.1} parent=1 // pred_check_branch
      %120 = sbr.rel (0) target = $region61
    $region60: #{tpu_custom_call.1} parent=1 // pred_region
      %122 = dma.done [#allocation10], 128
    $region61: #{tpu_custom_call.1} parent=1 // pred_fallthru
      _
    // Predicated region
    $region62: #{tpu_custom_call.1} parent=1 // pred_check
      _
    $region63: #{tpu_custom_call.1} parent=1 // pred_check_branch
      %124 = sbr.rel (0) target = $region65
    $region64: #{tpu_custom_call.1} parent=1 // pred_region
      %126 = dma.done [#allocation13], 256
    $region65: #{tpu_custom_call.1} parent=1 // pred_fallthru
      _
    %v128 = vld [vmem:[#allocation3] sm:$0xff]
    %v129 = vld [vmem:[#allocation6] sm:$0xff]
    %v130 = vmul.f32 %v128, %v129
    %v131 = vpack.c.bf16 %v128, %v128
    %v132 = vld [vmem:[#allocation8] sm:$0xf]
    %v133 = vld [vmem:[#allocation8 + $0x4] sm:$0xf]
    %v134 = vld [vmem:[#allocation8 + $0x8] sm:$0xf]
    %v135 = vld [vmem:[#allocation8 + $0xc] sm:$0xf]
    %v136 = vpack.c.bf16 %v129, %v129
    %v137 = vld [vmem:[#allocation9] sm:$0xf]
    %v138 = vld [vmem:[#allocation9 + $0x4] sm:$0xf]
    %v141 = vunpack.c.l.b16 %v137
    %v142 = vunpack.c.l.b16 %v138
    %v143 = vpack.c.b16 %v142, %v141
    %vm145 = vcmask 130048
    %v147 = vsel %vm145, %v136, 0
    %149 = vmatpush.bf16.msra.mxu0 0
    %150 = vmatpush.bf16.msra.mxu0 0
    %151 = vmatpush.bf16.msra.mxu0 0
    %152 = vmatpush.bf16.msra.mxu0 0
    %153 = vmatpush.bf16.msra.mxu0 0
    %154 = vmatpush.bf16.msra.mxu0 0
    %155 = vmatpush.bf16.msra.mxu0 0
    %156 = vmatpush.bf16.msra.mxu0 %v143
    %157 = vmatmul.bf16.gmra.mxu0 %v147
    %v158 = vpop.f32.mrf.mxu0
    %v159 = vadd.f32 0.0, %v158
    %v160 = vpop.f32.mrf.mxu0
    %161 = vdwg.mxu0
    %v166 = vunpack.c.l.b16 %v132
    %v167 = vunpack.c.l.b16 %v133
    %v168 = vunpack.c.l.b16 %v134
    %v169 = vunpack.c.l.b16 %v135
    %v170 = vpack.c.b16 %v167, %v166
    %v171 = vpack.c.b16 %v169, %v168
    %vm174 = vcmask 261120
    %v176 = vsel %vm174, %v131, 0
    %178 = vmatpush.bf16.msra.mxu0 0
    %179 = vmatpush.bf16.msra.mxu0 0
    %180 = vmatpush.bf16.msra.mxu0 0
    %181 = vmatpush.bf16.msra.mxu0 0
    %182 = vmatpush.bf16.msra.mxu0 0
    %183 = vmatpush.bf16.msra.mxu0 0
    %184 = vmatpush.bf16.msra.mxu0 %v171
    %185 = vmatpush.bf16.msra.mxu0 %v170
    %186 = vmatmul.bf16.gmra.mxu0 %v176
    %v187 = vpop.f32.mrf.mxu0
    %v188 = vadd.f32 %v159, %v187
    %v189 = vpop.f32.mrf.mxu0
    %190 = vdwg.mxu0
    %v191 = vpack.c.bf16 %v130, %v130
    %v192 = vld [vmem:[#allocation11] sm:$0xf]
    %v193 = vld [vmem:[#allocation11 + $0x4] sm:$0xf]
    %v196 = vunpack.c.l.b16 %v192
    %v197 = vunpack.c.l.b16 %v193
    %v198 = vpack.c.b16 %v197, %v196
    %v201 = vsel %vm145, %v191, 0
    %203 = vmatpush.bf16.msra.mxu0 0
    %204 = vmatpush.bf16.msra.mxu0 0
    %205 = vmatpush.bf16.msra.mxu0 0
    %206 = vmatpush.bf16.msra.mxu0 0
    %207 = vmatpush.bf16.msra.mxu0 0
    %208 = vmatpush.bf16.msra.mxu0 0
    %209 = vmatpush.bf16.msra.mxu0 0
    %210 = vmatpush.bf16.msra.mxu0 %v198
    %211 = vmatmul.bf16.gmra.mxu0 %v201
    %v212 = vpop.f32.mrf.mxu0
    %v213 = vadd.f32 0.0, %v212
    %v214 = vpop.f32.mrf.mxu0
    %215 = vdwg.mxu0
    %v216 = vadd.f32 %v188, %v213
    %v217 = vld [vmem:[%s5] sm:$0x1]
    %v219 = vperm.slane %v217, 0
    %v221 = vadd.f32 %v216, %v219
    %v222 = vmax.f32 %v221, 0.0
    %v223 = vpack.c.bf16 %v222, %v222
    %v224 = vld [vmem:[#allocation12] sm:$0xf]
    %v225 = vld [vmem:[#allocation12 + $0x4] sm:$0xf]
    %v226 = vld [vmem:[#allocation12 + $0x8] sm:$0xf]
    %v227 = vld [vmem:[#allocation12 + $0xc] sm:$0xf]
    %v228 = vld [vmem:[%s7] sm:$0x1]
    %v230 = vperm.slane %v228, 0
    %v236 = vunpack.c.l.b16 %v224
    %v237 = vunpack.c.l.b16 %v225
    %v238 = vunpack.c.l.b16 %v226
    %v239 = vunpack.c.l.b16 %v227
    %v240 = vpack.c.b16 %v237, %v236
    %v241 = vpack.c.b16 %v239, %v238
    %v245 = vsel %vm174, %v223, 0
    %247 = vmatpush.bf16.msra.mxu0 0
    %248 = vmatpush.bf16.msra.mxu0 0
    %249 = vmatpush.bf16.msra.mxu0 0
    %250 = vmatpush.bf16.msra.mxu0 0
    %251 = vmatpush.bf16.msra.mxu0 0
    %252 = vmatpush.bf16.msra.mxu0 0
    %253 = vmatpush.bf16.msra.mxu0 %v241
    %254 = vmatpush.bf16.msra.mxu0 %v240
    %255 = vmatmul.bf16.gmra.mxu0 %v245
    %v256 = vpop.f32.mrf.mxu0
    %v257 = vadd.f32 %v230, %v256
    %v258 = vpop.f32.mrf.mxu0
    %259 = vdwg.mxu0
    %v260 = vmax.f32 %v257, 0.0
    %v261 = vld [vmem:[%s8] sm:$0x1]
    %v262 = vpack.c.bf16 %v260, %v260
    %s263 = sld [smem:[#allocation2]]
    %v264 = vstv %s263
    %v266 = vsel %vm174, %v261, 0
    %v269 = vsel %vm174, %v262, 0
    %271 = vmatpush.bf16.xpose.msra.mxu0 0
    %272 = vmatpush.bf16.xpose.msra.mxu0 0
    %273 = vmatpush.bf16.xpose.msra.mxu0 0
    %274 = vmatpush.bf16.xpose.msra.mxu0 0
    %275 = vmatpush.bf16.xpose.msra.mxu0 0
    %276 = vmatpush.bf16.xpose.msra.mxu0 0
    %277 = vmatpush.bf16.xpose.msra.mxu0 0
    %278 = vmatpush.bf16.xpose.msra.mxu0 %v269
    %279 = vmatmul.bf16.gmra.mxu0 %v266
    %v280 = vpop.f32.mrf.mxu0
    %v281 = vadd.f32 %v264, %v280
    %v282 = vpop.f32.mrf.mxu0
    %283 = vdwg.mxu0
    %vm284 = vcmask 57344
    %285 = vst.msk [vmem:[#allocation14] sm:$0x1] %vm284, %v281
    // Predicated region
    $region66: #{tpu_custom_call.1} parent=1 // pred_check
      _
    $region67: #{tpu_custom_call.1} parent=1 // pred_check_branch
      %287 = sbr.rel (0) target = $region69
    $region68: #{tpu_custom_call.1} parent=1 // pred_region
      %289 = vsyncadd [#allocation5], 0
      %s291 = sshll.u32 [#allocation14], 4
      %s292 = int_to_ptr.vmem [resolvable:$true] %s291
      %s293 = sshll.u32 %s10, 4
      %s294 = int_to_ptr.hbm [resolvable:$true] %s293
      %296 = dma.vmem_to_hbm [thread:$0]  %s292, 16, %s294, [#allocation5]
    $region69: #{tpu_custom_call.1} parent=1 // pred_fallthru
      _
    // Predicated region
    $region70: #{tpu_custom_call.1} parent=1 // pred_check
      _
    $region71: #{tpu_custom_call.1} parent=1 // pred_check_branch
      %298 = sbr.rel (0) target = $region73
    $region72: #{tpu_custom_call.1} parent=1 // pred_region
      %300 = dma.done [#allocation5], 16
    $region73: #{tpu_custom_call.1} parent=1 // pred_fallthru
      _
    %301 = vsyncpa [#allocation4], 1
    %302 = vsyncpa [#allocation7], 1
    %303 = vsyncpa [#allocation10], 1
    %304 = vsyncpa [#allocation13], 1
    %305 = vsyncpa [#allocation5], 1

</llo_original>
